<compile_context>
chip_gen: v6e
topology: v6e:2x2x1
jax: 0.10.0
libtpu: 0.0.40
codegen_flags: <defaults>
</compile_context>

<pallas_src>
import functools
import math

import jax
import jax.numpy as jnp
from jax.experimental import pallas as pl
from jax.experimental.pallas import tpu as pltpu


# ---------------------------------------------------------------------------
# Phase 1: conv (roll+mask im2col, single MXU dot) + per-tile partial BN sums.
# ---------------------------------------------------------------------------
def _conv_stats_kernel(x_ref, w_ref, y_ref, s1_ref, s2_ref, *,
                       kernel_size, pad, kcin_pad, compute_dtype):
    # x_ref:  (tn, L, Cin)    input tile, NLC layout (original dtype, f32 here)
    # w_ref:  (kcin_pad, F)   conv weight, im2col layout, compute dtype
    # y_ref:  (tn, L, F)      f32 conv output tile
    # s1_ref: (1, L, 1)       partial sum   over (tile rows, F)
    # s2_ref: (1, L, 1)       partial sum^2 over (tile rows, F)
    tn, L, Cin = x_ref.shape
    k = kernel_size
    F = y_ref.shape[-1]

    x = x_ref[...]                                            # keep shifts in input dtype
    row = jax.lax.broadcasted_iota(jnp.int32, (1, L, 1), 1)   # row index, broadcast-ready

    # Window taps: out[i] = sum_j w_j . x[i + j - pad]  (zero outside [0, L)).
    taps = []
    for j in range(k):
        shift = pad - j
        shifted = pltpu.roll(x, shift=shift % L, axis=1) if (shift % L) else x
        lo, hi = shift, L + shift          # valid output rows: lo <= i < hi
        if lo > 0 and hi < L:
            mask = (row >= lo) & (row < hi)
        elif lo > 0:
            mask = row >= lo
        elif hi < L:
            mask = row < hi
        else:
            mask = None
        tap = shifted if mask is None else jnp.where(mask, shifted, jnp.zeros_like(shifted))
        taps.append(tap.astype(compute_dtype))

    extra = kcin_pad - k * Cin
    if extra > 0:                                             # pad contraction to sublane mult.
        taps.append(jnp.zeros((tn, L, extra), compute_dtype))

    cols = jnp.concatenate(taps, axis=-1)                     # (tn, L, kcin_pad)

    # Single MXU matmul, f32 accumulate.
    y = jnp.dot(cols.reshape(tn * L, kcin_pad), w_ref[...],
                preferred_element_type=jnp.float32).reshape(tn, L, F)
    y_ref[...] = y

    # Partial BN statistics for this tile (reduced over tile rows and F).
    s1_ref[...] = jnp.sum(y, axis=(0, 2), keepdims=True)
    s2_ref[...] = jnp.sum(y * y, axis=(0, 2), keepdims=True)


# ---------------------------------------------------------------------------
# Phase 2: fused BatchNorm scale/shift + LeakyReLU (pure streaming pass).
# ---------------------------------------------------------------------------
def _bn_act_kernel(y_ref, scale_ref, shift_ref, o_ref, *, neg_slope):
    yn = y_ref[...] * scale_ref[...] + shift_ref[...]         # single broadcast fma
    o_ref[...] = jnp.where(yn >= 0, yn, neg_slope * yn).astype(o_ref.dtype)


# ---------------------------------------------------------------------------
# Parameter prep (one-time, outside the hot path).
# ---------------------------------------------------------------------------
def prepare_c1d_params(conv_w, compute_dtype=jnp.bfloat16, row_align=8):
    """conv_w: (F, Cin, k) PyTorch layout -> (kcin_pad, F) im2col layout, compute dtype.

    The contraction dim k*Cin is zero-padded to a multiple of `row_align` (sublane mult.;
    use 128 at production shapes to fill the MXU)."""
    F, Cin, k = conv_w.shape
    w = jnp.transpose(conv_w, (2, 1, 0)).reshape(k * Cin, F)
    kcin_pad = ((k * Cin + row_align - 1) // row_align) * row_align
    if kcin_pad != k * Cin:
        w = jnp.concatenate([w, jnp.zeros((kcin_pad - k * Cin, F), w.dtype)], axis=0)
    return w.astype(compute_dtype)


def _choose_tile_n(N, L, Cin, F, kcin_pad, cd_bytes, budget_bytes=16 << 20):
    """Largest divisor of N whose double-buffered phase-1 live set fits the budget.

    Budget is deliberately conservative so the same tile works on v7x (64 MiB VMEM)
    as well as v5e/v6e (128 MiB)."""
    per_row = L * (4 * Cin                 # x tile (f32)
                   + 4 * kcin_pad          # transient shifted taps (f32)
                   + cd_bytes * kcin_pad   # cols (compute dtype)
                   + 8 * F)                # y tile (f32) + store buffer
    max_rows = max(1, budget_bytes // (2 * per_row))
    tn = 1
    for d in range(1, N + 1):
        if N % d == 0 and d <= max_rows:
            tn = d
    return tn


# ---------------------------------------------------------------------------
# Forward wrapper: two gridded pallas_calls + tiny stats combine in between.
# ---------------------------------------------------------------------------
def c1d_forward(x, w_im2col, gamma, beta, kernel_size, *,
                compute_dtype=jnp.bfloat16, eps=1e-5, neg_slope=0.2):
    """x: (N, L, Cin);  w_im2col: (kcin_pad, F);  gamma/beta: (L,)."""
    N, L, Cin = x.shape
    kcin_pad, F = w_im2col.shape
    pad = math.ceil((kernel_size - 1) / 2)
    cd_bytes = jnp.dtype(compute_dtype).itemsize
    x_bytes = jnp.dtype(x.dtype).itemsize

    tn = _choose_tile_n(N, L, Cin, F, kcin_pad, cd_bytes)
    grid_n = N // tn

    cparams = pltpu.CompilerParams(
        dimension_semantics=("parallel",),        # per-sample independent -> both v7x TCs
        vmem_limit_bytes=48 * 1024 * 1024)

    # ---- Phase 1: conv + partial BN sums --------------------------------------------
    kern1 = functools.partial(
        _conv_stats_kernel, kernel_size=kernel_size, pad=pad,
        kcin_pad=kcin_pad, compute_dtype=compute_dtype)

    cost1 = pl.CostEstimate(
        flops=int(2 * N * L * kcin_pad * F + 4 * N * L * F),
        transcendentals=0,
        bytes_accessed=int(N * L * Cin * x_bytes + kcin_pad * F * cd_bytes
                           + N * L * F * 4 + 2 * grid_n * L * 4))

    y, s1p, s2p = pl.pallas_call(
        kern1,
        out_shape=(jax.ShapeDtypeStruct((N, L, F), jnp.float32),
                   jax.ShapeDtypeStruct((grid_n, L, 1), jnp.float32),
                   jax.ShapeDtypeStruct((grid_n, L, 1), jnp.float32)),
        grid_spec=pltpu.PrefetchScalarGridSpec(
            num_scalar_prefetch=0,
            grid=(grid_n,),
            in_specs=[pl.BlockSpec((tn, L, Cin), lambda i: (i, 0, 0)),
                      pl.BlockSpec((kcin_pad, F), lambda i: (0, 0))],
            out_specs=(pl.BlockSpec((tn, L, F), lambda i: (i, 0, 0)),
                       pl.BlockSpec((1, L, 1), lambda i: (i, 0, 0)),
                       pl.BlockSpec((1, L, 1), lambda i: (i, 0, 0)))),
        compiler_params=cparams,
        cost_estimate=cost1,
    )(x, w_im2col)

    # ---- Tiny stats combine (L-sized; keeps stats exact under any N tiling) ----------
    cnt = float(N * F)
    s1 = jnp.sum(s1p, axis=0)[:, 0]                            # (L,)
    s2 = jnp.sum(s2p, axis=0)[:, 0]                            # (L,)
    mean = s1 / cnt
    var = jnp.maximum(s2 / cnt - mean * mean, 0.0)             # clamp (one-pass cancellation)
    scale = gamma.astype(jnp.float32) * jax.lax.rsqrt(var + eps)
    shift = beta.astype(jnp.float32) - mean * scale
    scale3 = scale.reshape(1, L, 1)
    shift3 = shift.reshape(1, L, 1)

    # ---- Phase 2: normalize + LeakyReLU ----------------------------------------------
    kern2 = functools.partial(_bn_act_kernel, neg_slope=neg_slope)
    cost2 = pl.CostEstimate(
        flops=int(4 * N * L * F),
        transcendentals=0,
        bytes_accessed=int(N * L * F * 4 + 2 * L * 4 + N * L * F * x_bytes))

    out = pl.pallas_call(
        kern2,
        out_shape=jax.ShapeDtypeStruct((N, L, F), x.dtype),
        grid_spec=pltpu.PrefetchScalarGridSpec(
            num_scalar_prefetch=0,
            grid=(grid_n,),
            in_specs=[pl.BlockSpec((tn, L, F), lambda i: (i, 0, 0)),
                      pl.BlockSpec((1, L, 1), lambda i: (0, 0, 0)),
                      pl.BlockSpec((1, L, 1), lambda i: (0, 0, 0))],
            out_specs=pl.BlockSpec((tn, L, F), lambda i: (i, 0, 0))),
        compiler_params=cparams,
        cost_estimate=cost2,
    )(y, scale3, shift3)
    return out


# ---------------------------------------------------------------------------
# Pure-JAX reference mirroring the PyTorch module (training-mode BN, biased var).
# ---------------------------------------------------------------------------
def reference_forward(x, conv_w, gamma, beta, kernel_size):
    p = math.ceil((kernel_size - 1) / 2)
    xp = jnp.transpose(x, (0, 2, 1))                           # (N, Cin, L)
    y = jax.lax.conv_general_dilated(
        xp, conv_w, window_strides=(1,), padding=[(p, p)],
        dimension_numbers=("NCH", "OIH", "NCH"))
    if kernel_size % 2 == 0:
        y = y[:, :, :-1]
    y = jnp.transpose(y, (0, 2, 1))                            # (N, L, F)
    mean = y.mean(axis=(0, 2), keepdims=True)
    var = ((y - mean) ** 2).mean(axis=(0, 2), keepdims=True)
    yn = (y - mean) / jnp.sqrt(var + 1e-5) * gamma.reshape(1, -1, 1) + beta.reshape(1, -1, 1)
    return jnp.where(yn >= 0, yn, 0.2 * yn)


if __name__ == "__main__":
    key = jax.random.PRNGKey(0)
    N, input_channels, input_dims, filters = 2, 16, 8, 32

    for kernel in (3, 4):  # odd kernel (no cut) and even kernel (cut_last_element)
        k1, k2, k3, k4 = jax.random.split(jax.random.fold_in(key, kernel), 4)
        x = jax.random.normal(k1, (N, input_channels, input_dims), jnp.float32)
        conv_w = jax.random.normal(k2, (filters, input_dims, kernel), jnp.float32) * 0.1
        gamma = 1.0 + 0.1 * jax.random.normal(k3, (input_channels,), jnp.float32)
        beta = 0.1 * jax.random.normal(k4, (input_channels,), jnp.float32)

        ref = reference_forward(x, conv_w, gamma, beta, kernel)

        # f32 operand path: tight-tolerance correctness check (test-only path).
        w32 = prepare_c1d_params(conv_w, compute_dtype=jnp.float32)
        out_f32 = c1d_forward(x, w32, gamma, beta, kernel, compute_dtype=jnp.float32)
        jax.block_until_ready(out_f32)
        assert out_f32.shape == (N, input_channels, filters)
        assert jnp.allclose(out_f32, ref, atol=1e-4, rtol=1e-4), f"f32 mismatch, kernel={kernel}"

        # bf16 operand path (production path on all generations): f32 accumulate + f32 BN.
        wbf = prepare_c1d_params(conv_w, compute_dtype=jnp.bfloat16)
        out_bf16 = c1d_forward(x, wbf, gamma, beta, kernel, compute_dtype=jnp.bfloat16)
        jax.block_until_ready(out_bf16)
        assert out_bf16.shape == (N, input_channels, filters)
        assert jnp.allclose(out_bf16, ref, atol=3e-2, rtol=3e-2), f"bf16 mismatch, kernel={kernel}"

    print("KERNEL_OK")
</pallas_src>

<mosaic_0001>
module attributes {stable_mosaic.version = 11 : i64} {
  func.func @_conv_stats_kernel(%arg0: i32, %arg1: memref<2x16x8xf32, #tpu.memory_space<vmem>>, %arg2: memref<24x32xf32, #tpu.memory_space<vmem>>, %arg3: memref<2x16x32xf32, #tpu.memory_space<vmem>>, %arg4: memref<1x16x1xf32, #tpu.memory_space<vmem>>, %arg5: memref<1x16x1xf32, #tpu.memory_space<vmem>>) attributes {dimension_semantics = [#tpu.dimension_semantics<parallel>], iteration_bounds = array<i64: 1>, scalar_prefetch = 0 : i64, scratch_operands = 0 : i64, tpu.core_type = #tpu.core_type<tc>, window_params = [{transform_indices = @transform_0, window_bounds = array<i64: 2, 16, 8>}, {pipeline_mode = #tpu.pipeline_mode<synchronous>, transform_indices = @transform_1, window_bounds = array<i64: 24, 32>}, {transform_indices = @transform_2, window_bounds = array<i64: 2, 16, 32>}, {transform_indices = @transform_3, window_bounds = array<i64: 1, 16, 1>}, {transform_indices = @transform_4, window_bounds = array<i64: 1, 16, 1>}]} {
    %c0 = arith.constant 0 : index
    %c0_0 = arith.constant 0 : index
    %c0_1 = arith.constant 0 : index
    %0 = vector.load %arg1[%c0, %c0_0, %c0_1] : memref<2x16x8xf32, #tpu.memory_space<vmem>>, vector<2x16x8xf32>
    %1 = tpu.iota {dimensions = array<i32: 1>} : vector<1x16x1xi32>
    %c1_i32 = arith.constant 1 : i32
    %2 = tpu.dynamic_rotate %0 by %c1_i32 dim 1 : vector<2x16x8xf32>, i32 -> vector<2x16x8xf32>
    %c1_i32_2 = arith.constant 1 : i32
    %3 = vector.broadcast %c1_i32_2 : i32 to vector<1x16x1xi32>
    %4 = arith.cmpi sge, %1, %3 : vector<1x16x1xi32>
    %cst = arith.constant 0.000000e+00 : f32
    %5 = vector.broadcast %cst : f32 to vector<2x16x8xf32>
    %6 = vector.shape_cast %4 : vector<1x16x1xi1> to vector<1x16x1xi1>
    %7 = vector.broadcast %6 : vector<1x16x1xi1> to vector<2x16x8xi1>
    %8 = arith.select %7, %2, %5 : vector<2x16x8xi1>, vector<2x16x8xf32>
    %c15_i32 = arith.constant 15 : i32
    %9 = tpu.dynamic_rotate %0 by %c15_i32 dim 1 : vector<2x16x8xf32>, i32 -> vector<2x16x8xf32>
    %c15_i32_3 = arith.constant 15 : i32
    %10 = vector.broadcast %c15_i32_3 : i32 to vector<1x16x1xi32>
    %11 = arith.cmpi slt, %1, %10 : vector<1x16x1xi32>
    %cst_4 = arith.constant 0.000000e+00 : f32
    %12 = vector.broadcast %cst_4 : f32 to vector<2x16x8xf32>
    %13 = vector.shape_cast %11 : vector<1x16x1xi1> to vector<1x16x1xi1>
    %14 = vector.broadcast %13 : vector<1x16x1xi1> to vector<2x16x8xi1>
    %15 = arith.select %14, %9, %12 : vector<2x16x8xi1>, vector<2x16x8xf32>
    %16 = tpu.concatenate %8, %0, %15 in 2 : vector<2x16x8xf32>, vector<2x16x8xf32>, vector<2x16x8xf32> -> vector<2x16x24xf32>
    %17 = vector.shape_cast %16 : vector<2x16x24xf32> to vector<32x24xf32>
    %c0_5 = arith.constant 0 : index
    %c0_6 = arith.constant 0 : index
    %18 = vector.load %arg2[%c0_5, %c0_6] : memref<24x32xf32, #tpu.memory_space<vmem>>, vector<24x32xf32>
    %cst_7 = arith.constant dense<0.000000e+00> : vector<32x32xf32>
    %19 = tpu.matmul %17, %18, %cst_7 {dimension_numbers = #tpu.dot_dimension_numbers<[1], [0], [0], [1], [0, 0, 1, 1], [], []>} : vector<32x24xf32>, vector<24x32xf32>, vector<32x32xf32> -> vector<32x32xf32>
    %20 = vector.shape_cast %19 : vector<32x32xf32> to vector<2x16x32xf32>
    %c0_8 = arith.constant 0 : index
    %c0_9 = arith.constant 0 : index
    %c0_10 = arith.constant 0 : index
    %21 = vector.load %arg3[%c0_8, %c0_9, %c0_10] : memref<2x16x32xf32, #tpu.memory_space<vmem>>, vector<2x16x32xf32>
    tpu.vector_store %arg3[%c0_8, %c0_9, %c0_10], %20 {strides = array<i32>} : memref<2x16x32xf32, #tpu.memory_space<vmem>>, vector<2x16x32xf32>,
    %cst_11 = arith.constant dense<0.000000e+00> : vector<16xf32>
    %22 = vector.multi_reduction <add>, %20, %cst_11 [0, 2] : vector<2x16x32xf32> to vector<16xf32>
    %23 = vector.shape_cast %22 : vector<16xf32> to vector<1x16x1xf32>
    %c0_12 = arith.constant 0 : index
    %c0_13 = arith.constant 0 : index
    %c0_14 = arith.constant 0 : index
    %24 = vector.load %arg4[%c0_12, %c0_13, %c0_14] : memref<1x16x1xf32, #tpu.memory_space<vmem>>, vector<1x16x1xf32>
    tpu.vector_store %arg4[%c0_12, %c0_13, %c0_14], %23 {strides = array<i32>} : memref<1x16x1xf32, #tpu.memory_space<vmem>>, vector<1x16x1xf32>,
    %25 = arith.mulf %20, %20 : vector<2x16x32xf32>
    %cst_15 = arith.constant dense<0.000000e+00> : vector<16xf32>
    %26 = vector.multi_reduction <add>, %25, %cst_15 [0, 2] : vector<2x16x32xf32> to vector<16xf32>
    %27 = vector.shape_cast %26 : vector<16xf32> to vector<1x16x1xf32>
    %c0_16 = arith.constant 0 : index
    %c0_17 = arith.constant 0 : index
    %c0_18 = arith.constant 0 : index
    %28 = vector.load %arg5[%c0_16, %c0_17, %c0_18] : memref<1x16x1xf32, #tpu.memory_space<vmem>>, vector<1x16x1xf32>
    tpu.vector_store %arg5[%c0_16, %c0_17, %c0_18], %27 {strides = array<i32>} : memref<1x16x1xf32, #tpu.memory_space<vmem>>, vector<1x16x1xf32>,
    return
  }
  func.func @transform_0(%arg0: i32) -> (i32, i32, i32) {
    %c0_i32 = arith.constant 0 : i32
    %c0_i32_0 = arith.constant 0 : i32
    %c0_i32_1 = arith.constant 0 : i32
    return %arg0, %c0_i32, %c0_i32_0 : i32, i32, i32
  }
  func.func @transform_1(%arg0: i32) -> (i32, i32) {
    %c0_i32 = arith.constant 0 : i32
    %c0_i32_0 = arith.constant 0 : i32
    %c0_i32_1 = arith.constant 0 : i32
    return %c0_i32, %c0_i32_0 : i32, i32
  }
  func.func @transform_2(%arg0: i32) -> (i32, i32, i32) {
    %c0_i32 = arith.constant 0 : i32
    %c0_i32_0 = arith.constant 0 : i32
    %c0_i32_1 = arith.constant 0 : i32
    return %arg0, %c0_i32, %c0_i32_0 : i32, i32, i32
  }
  func.func @transform_3(%arg0: i32) -> (i32, i32, i32) {
    %c0_i32 = arith.constant 0 : i32
    %c0_i32_0 = arith.constant 0 : i32
    %c0_i32_1 = arith.constant 0 : i32
    return %arg0, %c0_i32, %c0_i32_0 : i32, i32, i32
  }
  func.func @transform_4(%arg0: i32) -> (i32, i32, i32) {
    %c0_i32 = arith.constant 0 : i32
    %c0_i32_0 = arith.constant 0 : i32
    %c0_i32_1 = arith.constant 0 : i32
    return %arg0, %c0_i32, %c0_i32_0 : i32, i32, i32
  }
}

</mosaic_0001>

<llo_original>
// kernel: tpu_custom_call.1
$region0: #{tpu_custom_call.1}
  #allocation0 [shape = 'u32[]', space=smem, size = 0x4, offset = 0x4, fixed_abs, tag = 'smem constant byte address 0x4 - core index']
  #allocation1 [shape = 'u32[144,128]{1,0:T(1,128)}', space=vmem, size = 0x12000, scoped, tag = 'internal scratch']
  %s0 = inlined_call_operand.vmem [shape: f32[2,16,8], index: 0, kind: input, shape index: {}]
  %s1 = inlined_call_operand.vmem [shape: f32[24,32], index: 1, kind: input, shape index: {}]
  %s2 = inlined_call_operand.hbm [shape: f32[2,16,32], index: 2, kind: output, shape index: {0}]
  %s3 = inlined_call_operand.vmem [shape: f32[1,16,1], index: 3, kind: output, shape index: {1}]
  %s4 = inlined_call_operand.vmem [shape: f32[1,16,1], index: 4, kind: output, shape index: {2}]
  %5 = xla_tuple %s2, %s3, %s4
  %s6 = sld [smem:[#allocation0]]
  $region34: #{tpu_custom_call.1} parent=0
    _
  %s8 = ssub.s32 1, %s6
  %s9 = scalar_select 0, %s8, %s6
  $region1: #{tpu_custom_call.1} parent=0
    #allocation2 [shape = 'u8[16384]{0}', space=vmem, size = 0x4000, scoped, tag = 'output window, operand 0, single buffered']
    #allocation3 [shape = 's32[1]{0}', space=sflag, size = 0x4, scoped, tag = 'scoped memory for tpu_custom_call.1']
    %10 = vsyncpa [#allocation3], 0
    // Predicated region
    $region2: #{tpu_custom_call.1} parent=1 // pred_check
      _
    $region3: #{tpu_custom_call.1} parent=1 // pred_check_branch
      %12 = sbr.rel (0) target = $region5
    $region4: #{tpu_custom_call.1} parent=1 // pred_region
      _
    $region5: #{tpu_custom_call.1} parent=1 // pred_fallthru
      _
    // Predicated region
    $region6: #{tpu_custom_call.1} parent=1 // pred_check
      _
    $region7: #{tpu_custom_call.1} parent=1 // pred_check_branch
      %14 = sbr.rel (0) target = $region9
    $region8: #{tpu_custom_call.1} parent=1 // pred_region
      _
    $region9: #{tpu_custom_call.1} parent=1 // pred_fallthru
      _
    %v15 = vld [vmem:[%s0] sm:$0xff]
    %v16 = vld [vmem:[%s0 + $0x8] sm:$0xff]
    %v17 = vld [vmem:[%s0 + $0x10] sm:$0xff]
    %v18 = vld [vmem:[%s0 + $0x18] sm:$0xff]
    %v19 = vlaneseq
    %v20 = vshrl.u32 %v19, 7
    %v21 = vadd.s32 %v20, 8
    %v22 = vrot.slane %v15, 7
    %v23 = vrot.slane %v17, 7
    %v24 = vrot.slane %v16, 7
    %v25 = vrot.slane %v18, 7
    %vm26 = vcmp.lt.s32.totalorder %v20, 1
    %v27 = vsel %vm26, %v22, %v24
    %v28 = vsel %vm26, %v23, %v25
    %v29 = vsel %vm26, %v24, %v22
    %v30 = vsel %vm26, %v25, %v23
    %vm31 = vcmp.ge.s32.totalorder %v20, 1
    %vm32 = vcmp.ge.s32.totalorder %v21, 1
    %v33 = vsel %vm31, 1, 0
    %v34 = vsel %vm32, 1, 0
    %vm35 = vcmp.eq.s32.totalorder %v33, 1
    %vm36 = vcmp.eq.s32.totalorder %v34, 1
    %v37 = vsel %vm35, %v29, 0.0
    %v38 = vsel %vm36, %v27, 0.0
    %v39 = vsel %vm35, %v30, 0.0
    %v40 = vsel %vm36, %v28, 0.0
    %v41 = vrot.slane %v15, 1
    %v42 = vrot.slane %v17, 1
    %v43 = vrot.slane %v16, 1
    %v44 = vrot.slane %v18, 1
    %vm45 = vcmp.lt.s32.totalorder %v20, 7
    %v46 = vsel %vm45, %v41, %v43
    %v47 = vsel %vm45, %v42, %v44
    %v48 = vsel %vm45, %v43, %v41
    %v49 = vsel %vm45, %v44, %v42
    %vm50 = vcmp.lt.s32.totalorder %v20, 15
    %vm51 = vcmp.lt.s32.totalorder %v21, 15
    %v52 = vsel %vm50, 1, 0
    %v53 = vsel %vm51, 1, 0
    %vm54 = vcmp.eq.s32.totalorder %v52, 1
    %vm55 = vcmp.eq.s32.totalorder %v53, 1
    %v56 = vsel %vm54, %v46, 0.0
    %v57 = vsel %vm55, %v48, 0.0
    %v58 = vsel %vm54, %v47, 0.0
    %v59 = vsel %vm55, %v49, 0.0
    %64 = vrot.lane.b32.xlu0 %v15, 8
    %v65 = vpop.permute.xlu0 %64
    %66 = vrot.lane.b32.xlu0 %v16, 8
    %v67 = vpop.permute.xlu0 %66
    %68 = vrot.lane.b32.xlu0 %v17, 8
    %v69 = vpop.permute.xlu0 %68
    %70 = vrot.lane.b32.xlu0 %v18, 8
    %v71 = vpop.permute.xlu0 %70
    %80 = vrot.lane.b32.xlu0 %v56, 16
    %v81 = vpop.permute.xlu0 %80
    %82 = vrot.lane.b32.xlu0 %v57, 16
    %v83 = vpop.permute.xlu0 %82
    %84 = vrot.lane.b32.xlu0 %v58, 16
    %v85 = vpop.permute.xlu0 %84
    %86 = vrot.lane.b32.xlu0 %v59, 16
    %v87 = vpop.permute.xlu0 %86
    %vm92 = vcmask 64512
    %v93 = vsel %vm92, %v37, %v65
    %v94 = vsel %vm92, %v38, %v67
    %v95 = vsel %vm92, %v39, %v69
    %v96 = vsel %vm92, %v40, %v71
    %vm97 = vcmask 130048
    %v98 = vsel %vm97, %v93, %v81
    %v99 = vsel %vm97, %v94, %v83
    %v100 = vsel %vm97, %v95, %v85
    %v101 = vsel %vm97, %v96, %v87
    %v102 = vld [vmem:[%s1] sm:$0xff]
    %v103 = vld [vmem:[%s1 + $0x8] sm:$0xff]
    %v104 = vld [vmem:[%s1 + $0x10] sm:$0xff]
    %vm105 = vcmask 195584
    %v107 = vsel %vm105, %v98, 0
    %v110 = vsel %vm105, %v99, 0
    %v113 = vsel %vm105, %v100, 0
    %v116 = vsel %vm105, %v101, 0
    %118 = vmatprep.subr.mxu0 0.0
    %119 = vmatpush1.msra.mxu0 0.0
    %120 = vmatprep.subr.mxu0 0.0
    %121 = vmatpush1.msra.mxu0 0.0
    %122 = vmatprep.subr.mxu0 0.0
    %123 = vmatpush1.msra.mxu0 0.0
    %124 = vmatprep.subr.mxu0 0.0
    %125 = vmatpush1.msra.mxu0 0.0
    %126 = vmatprep.subr.mxu0 0.0
    %127 = vmatpush1.msra.mxu0 0.0
    %128 = vmatprep.subr.mxu0 0.0
    %129 = vmatpush1.msra.mxu0 0.0
    %130 = vmatprep.subr.mxu0 0.0
    %131 = vmatpush1.msra.mxu0 0.0
    %132 = vmatprep.subr.mxu0 0.0
    %133 = vmatpush1.msra.mxu0 0.0
    %134 = vmatprep.subr.mxu0 0.0
    %135 = vmatpush1.msra.mxu0 0.0
    %136 = vmatprep.subr.mxu0 0.0
    %137 = vmatpush1.msra.mxu0 0.0
    %138 = vmatprep.subr.mxu0 0.0
    %139 = vmatpush1.msra.mxu0 0.0
    %140 = vmatprep.subr.mxu0 0.0
    %141 = vmatpush1.msra.mxu0 0.0
    %142 = vmatprep.subr.mxu0 0.0
    %143 = vmatpush1.msra.mxu0 0.0
    %144 = vmatprep.subr.mxu0 0.0
    %145 = vmatpush1.msra.mxu0 %v104
    %146 = vmatprep.subr.mxu0 0.0
    %147 = vmatpush1.msra.mxu0 %v103
    %148 = vmatprep.subr.mxu0 0.0
    %149 = vmatpush1.msra.mxu0 %v102
    %150 = vmatprep.subr.mxu0 0.0
    %151 = vmatpush2.msra.mxu0 0.0
    %152 = vmatprep.subr.mxu0 0.0
    %153 = vmatpush2.msra.mxu0 0.0
    %154 = vmatprep.subr.mxu0 0.0
    %155 = vmatpush2.msra.mxu0 0.0
    %156 = vmatprep.subr.mxu0 0.0
    %157 = vmatpush2.msra.mxu0 0.0
    %158 = vmatprep.subr.mxu0 0.0
    %159 = vmatpush2.msra.mxu0 0.0
    %160 = vmatprep.subr.mxu0 0.0
    %161 = vmatpush2.msra.mxu0 0.0
    %162 = vmatprep.subr.mxu0 0.0
    %163 = vmatpush2.msra.mxu0 0.0
    %164 = vmatprep.subr.mxu0 0.0
    %165 = vmatpush2.msra.mxu0 0.0
    %166 = vmatprep.subr.mxu0 0.0
    %167 = vmatpush2.msra.mxu0 0.0
    %168 = vmatprep.subr.mxu0 0.0
    %169 = vmatpush2.msra.mxu0 0.0
    %170 = vmatprep.subr.mxu0 0.0
    %171 = vmatpush2.msra.mxu0 0.0
    %172 = vmatprep.subr.mxu0 0.0
    %173 = vmatpush2.msra.mxu0 0.0
    %174 = vmatprep.subr.mxu0 0.0
    %175 = vmatpush2.msra.mxu0 0.0
    %176 = vmatprep.subr.mxu0 0.0
    %177 = vmatpush2.msra.mxu0 0.0
    %178 = vmatprep.subr.mxu0 0.0
    %179 = vmatpush2.msra.mxu0 0.0
    %180 = vmatprep.subr.mxu0 0.0
    %181 = vmatpush2.msra.mxu0 0.0
    %182 = vmatprep.mubr.f32.mxu0 0.0
    %183 = vmatmul.mubr.f32.gmra.mxu0 %v107
    %v184 = vpop.f32.mrf.mxu0
    %v185 = vadd.f32 0.0, %v184
    %v186 = vpop.f32.mrf.mxu0
    %187 = vmatprep.mubr.f32.mxu0 0.0
    %188 = vmatmul.mubr.f32.gmra.mxu0 %v110
    %v189 = vpop.f32.mrf.mxu0
    %v190 = vadd.f32 0.0, %v189
    %v191 = vpop.f32.mrf.mxu0
    %192 = vmatprep.mubr.f32.mxu0 0.0
    %193 = vmatmul.mubr.f32.gmra.mxu0 %v113
    %v194 = vpop.f32.mrf.mxu0
    %v195 = vadd.f32 0.0, %v194
    %v196 = vpop.f32.mrf.mxu0
    %197 = vmatprep.mubr.f32.mxu0 0.0
    %198 = vmatmul.mubr.f32.gmra.mxu0 %v116
    %v199 = vpop.f32.mrf.mxu0
    %v200 = vadd.f32 0.0, %v199
    %v201 = vpop.f32.mrf.mxu0
    %202 = vdwg.mxu0
    %vm203 = vcmask 261120
    %204 = vst.msk [vmem:[#allocation2] sm:$0xff] %vm203, %v185
    %205 = vst.msk [vmem:[#allocation2 + $0x8] sm:$0xff] %vm203, %v190
    %206 = vst.msk [vmem:[#allocation2 + $0x10] sm:$0xff] %vm203, %v195
    %207 = vst.msk [vmem:[#allocation2 + $0x18] sm:$0xff] %vm203, %v200
    %v208 = vsel %vm203, %v185, 0.0
    %v209 = vsel %vm203, %v195, 0.0
    %v210 = vadd.f32 %v208, %v209
    %211 = vadd.xlane.f32.xlu0 %v210
    %v212 = vpop.xlane.xlu0 %211
    %v213 = vsel %vm203, %v190, 0.0
    %v214 = vsel %vm203, %v200, 0.0
    %v215 = vadd.f32 %v213, %v214
    %216 = vadd.xlane.f32.xlu0 %v215
    %v217 = vpop.xlane.xlu0 %216
    %vm218 = vcmask 7168
    %219 = vst.msk [vmem:[%s3] sm:$0xff] %vm218, %v212
    %220 = vst.msk [vmem:[%s3 + $0x8] sm:$0xff] %vm218, %v217
    %v221 = vmul.f32 %v185, %v185
    %v222 = vmul.f32 %v190, %v190
    %v223 = vmul.f32 %v195, %v195
    %v224 = vmul.f32 %v200, %v200
    %v225 = vsel %vm203, %v221, 0.0
    %v226 = vsel %vm203, %v223, 0.0
    %v227 = vadd.f32 %v225, %v226
    %228 = vadd.xlane.f32.xlu0 %v227
    %v229 = vpop.xlane.xlu0 %228
    %v230 = vsel %vm203, %v222, 0.0
    %v231 = vsel %vm203, %v224, 0.0
    %v232 = vadd.f32 %v230, %v231
    %233 = vadd.xlane.f32.xlu0 %v232
    %v234 = vpop.xlane.xlu0 %233
    %235 = vst.msk [vmem:[%s4] sm:$0xff] %vm218, %v229
    %236 = vst.msk [vmem:[%s4 + $0x8] sm:$0xff] %vm218, %v234
    // Predicated region
    $region10: #{tpu_custom_call.1} parent=1 // pred_check
      _
    $region11: #{tpu_custom_call.1} parent=1 // pred_check_branch
      %238 = sbr.rel (0) target = $region13
    $region12: #{tpu_custom_call.1} parent=1 // pred_region
      %s240 = ssub.s32 512, 512
      %241 = vsyncadd [#allocation3], %s240
      %s242 = sshll.u32 [#allocation2], 4
      %s243 = int_to_ptr.vmem [resolvable:$true] %s242
      %248 = dma.vmem_to_hbm [thread:$0]  %s243, 512, %s2, [#allocation3], 128, 128, 8
    $region13: #{tpu_custom_call.1} parent=1 // pred_fallthru
      _
    // Predicated region
    $region14: #{tpu_custom_call.1} parent=1 // pred_check
      _
    $region15: #{tpu_custom_call.1} parent=1 // pred_check_branch
      %250 = sbr.rel (0) target = $region17
    $region16: #{tpu_custom_call.1} parent=1 // pred_region
      _
    $region17: #{tpu_custom_call.1} parent=1 // pred_fallthru
      _
    // Predicated region
    $region18: #{tpu_custom_call.1} parent=1 // pred_check
      _
    $region19: #{tpu_custom_call.1} parent=1 // pred_check_branch
      %252 = sbr.rel (0) target = $region21
    $region20: #{tpu_custom_call.1} parent=1 // pred_region
      _
    $region21: #{tpu_custom_call.1} parent=1 // pred_fallthru
      _
    // Predicated region
    $region22: #{tpu_custom_call.1} parent=1 // pred_check
      _
    $region23: #{tpu_custom_call.1} parent=1 // pred_check_branch
      %254 = sbr.rel (0) target = $region25
    $region24: #{tpu_custom_call.1} parent=1 // pred_region
      %255 = dma.done [#allocation3], 512
    $region25: #{tpu_custom_call.1} parent=1 // pred_fallthru
      _
    // Predicated region
    $region26: #{tpu_custom_call.1} parent=1 // pred_check
      _
    $region27: #{tpu_custom_call.1} parent=1 // pred_check_branch
      %257 = sbr.rel (0) target = $region29
    $region28: #{tpu_custom_call.1} parent=1 // pred_region
      _
    $region29: #{tpu_custom_call.1} parent=1 // pred_fallthru
      _
    // Predicated region
    $region30: #{tpu_custom_call.1} parent=1 // pred_check
      _
    $region31: #{tpu_custom_call.1} parent=1 // pred_check_branch
      %259 = sbr.rel (0) target = $region33
    $region32: #{tpu_custom_call.1} parent=1 // pred_region
      _
    $region33: #{tpu_custom_call.1} parent=1 // pred_fallthru
      _
    %260 = vsyncpa [#allocation3], 1

</llo_original>
